<compile_context>
chip_gen: v6e
topology: v6e:2x2x1
jax: 0.10.0
libtpu: 0.0.40
codegen_flags: <defaults>
</compile_context>

<pallas_src>
import jax
import jax.numpy as jnp
from jax.experimental import pallas as pl
from jax.experimental.pallas import tpu as pltpu

LANES = 128
_MAX_DMA_CHUNKS = 4  # a few DMAs in flight is enough to hit HBM roofline


def _chunk_first_axis(n, max_chunks, align):
    """Split [0, n) along the first axis into <= max_chunks static chunks whose
    sizes (except possibly the last) are multiples of `align`."""
    if n <= 0:
        return []
    chunk = -(-n // max_chunks)              # ceil(n / max_chunks)
    chunk = -(-chunk // align) * align       # round up to alignment
    chunks = []
    start = 0
    while start < n:
        size = min(chunk, n - start)
        chunks.append((start, size))
        start += size
    return chunks


def _make_hbm_copy_kernel(chunks):
    """Kernel factory: direct HBM->HBM copy in a few large chunks.

    x_ref / o_ref are raw HBM refs (memory_space=pl.ANY).  All chunk DMAs are
    started back-to-back (kept in flight), then waited on.  No grid, no VMEM.
    """
    def kernel(x_ref, o_ref, sem):
        copies = []
        for idx, (start, size) in enumerate(chunks):
            cp = pltpu.make_async_copy(
                x_ref.at[pl.ds(start, size)],
                o_ref.at[pl.ds(start, size)],
                sem.at[idx])
            cp.start()
            copies.append(cp)
        for cp in copies:
            cp.wait()
    return kernel


def pallas_view(x, shape, materialize=False):
    """Equivalent of torch.Tensor.view(shape) where `shape` is a single int
    (or -1 meaning 'infer').

    materialize=False (default): free metadata reshape — zero HBM traffic,
        identical semantics/cost to torch .view.
    materialize=True: produce a distinct buffer via chunked direct HBM->HBM
        DMA in a Pallas kernel (no VMEM staging, no grid overhead).
    """
    total = x.size
    if shape == -1:
        shape = total
    assert shape == total, (
        f"view size {shape} incompatible with input of {total} elements")

    if not materialize or total == 0:
        # Contiguous flatten is metadata-only in XLA — same as torch .view.
        return x.reshape(shape)

    itemsize = jnp.dtype(x.dtype).itemsize

    if total % LANES == 0:
        # Lane-dense 2-D slab (rows x 128); chunk along rows on a sublane
        # multiple appropriate for the dtype width.
        rows = total // LANES
        sub_mult = {4: 8, 2: 16, 1: 32}.get(itemsize, 8)
        src = x.reshape(rows, LANES)
        chunks = _chunk_first_axis(rows, _MAX_DMA_CHUNKS, sub_mult)
    else:
        # Rare non-lane-aligned case: chunk the flat 1-D stream directly.
        src = x.reshape(total)
        chunks = _chunk_first_axis(total, _MAX_DMA_CHUNKS, LANES)

    out = pl.pallas_call(
        _make_hbm_copy_kernel(chunks),
        out_shape=jax.ShapeDtypeStruct(src.shape, x.dtype),
        in_specs=[pl.BlockSpec(memory_space=pl.ANY)],   # raw HBM ref, no auto-DMA
        out_specs=pl.BlockSpec(memory_space=pl.ANY),    # raw HBM ref, no auto-DMA
        scratch_shapes=[pltpu.SemaphoreType.DMA((len(chunks),))],
        # Pure memory traffic: read + write of the whole tensor.
        cost_estimate=pl.CostEstimate(
            flops=0, transcendentals=0, bytes_accessed=2 * total * itemsize),
    )(src)

    return out.reshape(shape)


class View:
    """JAX/Pallas mirror of the PyTorch View module (no parameters).

    The forward pass is a view (flatten to `shape` elements): metadata-only,
    so the default call path is the free reshape.  Set materialize=True to
    force a distinct buffer via the Pallas HBM->HBM DMA kernel.
    """

    def __init__(self, shape):
        self.shape = (shape,)

    def __call__(self, x, materialize=False):
        return pallas_view(x, self.shape[0], materialize=materialize)


if __name__ == "__main__":
    key = jax.random.PRNGKey(0)
    # Small NCHW-style input consistent with a CNN-GAN feature map.
    x = jax.random.normal(key, (2, 4, 16, 16), dtype=jnp.float32)

    total = 2 * 4 * 16 * 16  # 2048 — View(2048) flattens the tensor
    mod = View(total)
    ref = x.reshape(total)

    # Hot path: free metadata reshape (matches torch .view exactly).
    y_fast = jax.block_until_ready(mod(x))
    assert y_fast.shape == (total,)
    assert y_fast.dtype == x.dtype
    assert bool(jnp.all(y_fast == ref))

    # Materialized path: run the Pallas HBM->HBM DMA copy kernel once.
    y_copy = jax.block_until_ready(mod(x, materialize=True))
    assert y_copy.shape == (total,)
    assert y_copy.dtype == x.dtype
    assert bool(jnp.all(y_copy == ref))

    print("KERNEL_OK")
</pallas_src>

<mosaic_0001>
module attributes {stable_mosaic.version = 11 : i64} {
  func.func @kernel(%arg0: memref<16x128xf32, #tpu.memory_space<any>>, %arg1: memref<16x128xf32, #tpu.memory_space<any>>, %arg2: memref<2x!tpu.dma_semaphore, #tpu.memory_space<semaphore_mem>>) attributes {dimension_semantics = [], scalar_prefetch = 0 : i64, scratch_operands = 1 : i64, tpu.core_type = #tpu.core_type<tc>} {
    %c0_i32 = arith.constant 0 : i32
    %c0_i32_0 = arith.constant 0 : i32
    %c0_i32_1 = arith.constant 0 : i32
    %0 = tpu.memref_slice %arg0[%c0_i32_0, %c0_i32_1] : memref<16x128xf32, #tpu.memory_space<any>> -> memref<8x128xf32, #tpu.memory_space<any>>
    %c0_i32_2 = arith.constant 0 : i32
    %c0_i32_3 = arith.constant 0 : i32
    %1 = tpu.memref_slice %arg1[%c0_i32_2, %c0_i32_3] : memref<16x128xf32, #tpu.memory_space<any>> -> memref<8x128xf32, #tpu.memory_space<any>>
    %2 = tpu.memref_slice %arg2[%c0_i32] : memref<2x!tpu.dma_semaphore, #tpu.memory_space<semaphore_mem>> -> memref<1x!tpu.dma_semaphore, #tpu.memory_space<semaphore_mem>>
    %3 = tpu.memref_squeeze %2 : memref<1x!tpu.dma_semaphore, #tpu.memory_space<semaphore_mem>> -> memref<!tpu.dma_semaphore, #tpu.memory_space<semaphore_mem>>
    tpu.enqueue_dma source(%0 : memref<8x128xf32, #tpu.memory_space<any>>) target(%1 : memref<8x128xf32, #tpu.memory_space<any>>) target_semaphore(%3 : memref<!tpu.dma_semaphore, #tpu.memory_space<semaphore_mem>>)
    %c1_i32 = arith.constant 1 : i32
    %c8_i32 = arith.constant 8 : i32
    %c0_i32_4 = arith.constant 0 : i32
    %4 = tpu.memref_slice %arg0[%c8_i32, %c0_i32_4] : memref<16x128xf32, #tpu.memory_space<any>> -> memref<8x128xf32, #tpu.memory_space<any>>
    %c8_i32_5 = arith.constant 8 : i32
    %c0_i32_6 = arith.constant 0 : i32
    %5 = tpu.memref_slice %arg1[%c8_i32_5, %c0_i32_6] : memref<16x128xf32, #tpu.memory_space<any>> -> memref<8x128xf32, #tpu.memory_space<any>>
    %6 = tpu.memref_slice %arg2[%c1_i32] : memref<2x!tpu.dma_semaphore, #tpu.memory_space<semaphore_mem>> -> memref<1x!tpu.dma_semaphore, #tpu.memory_space<semaphore_mem>>
    %7 = tpu.memref_squeeze %6 : memref<1x!tpu.dma_semaphore, #tpu.memory_space<semaphore_mem>> -> memref<!tpu.dma_semaphore, #tpu.memory_space<semaphore_mem>>
    tpu.enqueue_dma source(%4 : memref<8x128xf32, #tpu.memory_space<any>>) target(%5 : memref<8x128xf32, #tpu.memory_space<any>>) target_semaphore(%7 : memref<!tpu.dma_semaphore, #tpu.memory_space<semaphore_mem>>)
    %c0_i32_7 = arith.constant 0 : i32
    %c0_i32_8 = arith.constant 0 : i32
    %c0_i32_9 = arith.constant 0 : i32
    %8 = tpu.memref_slice %arg0[%c0_i32_8, %c0_i32_9] : memref<16x128xf32, #tpu.memory_space<any>> -> memref<8x128xf32, #tpu.memory_space<any>>
    %c0_i32_10 = arith.constant 0 : i32
    %c0_i32_11 = arith.constant 0 : i32
    %9 = tpu.memref_slice %arg1[%c0_i32_10, %c0_i32_11] : memref<16x128xf32, #tpu.memory_space<any>> -> memref<8x128xf32, #tpu.memory_space<any>>
    %10 = tpu.memref_slice %arg2[%c0_i32_7] : memref<2x!tpu.dma_semaphore, #tpu.memory_space<semaphore_mem>> -> memref<1x!tpu.dma_semaphore, #tpu.memory_space<semaphore_mem>>
    %11 = tpu.memref_squeeze %10 : memref<1x!tpu.dma_semaphore, #tpu.memory_space<semaphore_mem>> -> memref<!tpu.dma_semaphore, #tpu.memory_space<semaphore_mem>>
    tpu.wait_dma2 semaphore(%11 : memref<!tpu.dma_semaphore, #tpu.memory_space<semaphore_mem>>) src(%8 : memref<8x128xf32, #tpu.memory_space<any>>) dst(%9 : memref<8x128xf32, #tpu.memory_space<any>>)
    %c1_i32_12 = arith.constant 1 : i32
    %c8_i32_13 = arith.constant 8 : i32
    %c0_i32_14 = arith.constant 0 : i32
    %12 = tpu.memref_slice %arg0[%c8_i32_13, %c0_i32_14] : memref<16x128xf32, #tpu.memory_space<any>> -> memref<8x128xf32, #tpu.memory_space<any>>
    %c8_i32_15 = arith.constant 8 : i32
    %c0_i32_16 = arith.constant 0 : i32
    %13 = tpu.memref_slice %arg1[%c8_i32_15, %c0_i32_16] : memref<16x128xf32, #tpu.memory_space<any>> -> memref<8x128xf32, #tpu.memory_space<any>>
    %14 = tpu.memref_slice %arg2[%c1_i32_12] : memref<2x!tpu.dma_semaphore, #tpu.memory_space<semaphore_mem>> -> memref<1x!tpu.dma_semaphore, #tpu.memory_space<semaphore_mem>>
    %15 = tpu.memref_squeeze %14 : memref<1x!tpu.dma_semaphore, #tpu.memory_space<semaphore_mem>> -> memref<!tpu.dma_semaphore, #tpu.memory_space<semaphore_mem>>
    tpu.wait_dma2 semaphore(%15 : memref<!tpu.dma_semaphore, #tpu.memory_space<semaphore_mem>>) src(%12 : memref<8x128xf32, #tpu.memory_space<any>>) dst(%13 : memref<8x128xf32, #tpu.memory_space<any>>)
    return
  }
}

</mosaic_0001>

<llo_original>
// kernel: tpu_custom_call.1
$region0: #{tpu_custom_call.1}
  #allocation0 [shape = 'u32[]', space=smem, size = 0x4, offset = 0x4, fixed_abs, tag = 'smem constant byte address 0x4 - core index']
  #allocation1 [shape = 'u32[144,128]{1,0:T(1,128)}', space=vmem, size = 0x12000, scoped, tag = 'internal scratch']
  #allocation2 [shape = 's32[2]{0}', space=sflag, size = 0x8, scoped, tag = 'scratch operand']
  #allocation3 [shape = 's32[]', space=sflag, size = 0x4, offset = 0, fixed_abs, tag = 'sflag constant byte address 0x0 - dummy sync flag']
  #allocation4 [shape = 'u32[0]{0}', space=smem, size = 0, offset = 0, fixed_abs, tag = 'smem constant byte address 0x0 - null']
  #allocation5 [shape = 's32[]', space=sflag, size = 0x4, offset = 0, fixed_abs, tag = 'sflag constant byte address 0x0 - dummy sync flag']
  #allocation6 [shape = 'u32[0]{0}', space=smem, size = 0, offset = 0, fixed_abs, tag = 'smem constant byte address 0x0 - null']
  %s0 = inlined_call_operand.hbm [shape: f32[16,128], index: 0, kind: input, shape index: {}]
  %s1 = inlined_call_operand.hbm [shape: f32[16,128], index: 1, kind: output, shape index: {}]
  %s2 = sld [smem:[#allocation0]]
  $region2: #{tpu_custom_call.1} parent=0
    _
  %s4 = ssub.s32 1, %s2
  %s5 = scalar_select 0, %s4, %s2
  %s7 = sshll.u32 1, 14
  %s8 = sxor.u32 4294967295, %s7
  %12 = dma.general %s0, 128, %s1, [#allocation2], 131072, [#allocation4], 0, 0
  %s13 = scalar_lea.hbm %s0, 128
  %s14 = scalar_lea.hbm %s1, 128
  %s15 = scalar_lea.sflag [#allocation2], 1
  %s17 = sshll.u32 1, 14
  %s18 = sxor.u32 4294967295, %s17
  %22 = dma.general %s13, 128, %s14, %s15, 131072, [#allocation6], 0, 0
  %s23 = smul.u32 8, 1
  %s24 = sshll.u32 %s23, 4
  %25 = dma.done [#allocation2], %s24
  %s26 = sshll.u32 %s23, 4
  %27 = dma.done %s15, %s26
  %28 = vsyncmov [#allocation2]
  %s29 = vpop.sfrf %28
  %p30 = scmp.eq.s32.totalorder %s29, 0
  %p31 = pneg %p30
  %33 = shalt.err (%p31)
  %s34 = scalar_lea.sflag [#allocation2], 1
  %35 = vsyncmov %s34
  %s36 = vpop.sfrf %35
  %p37 = scmp.eq.s32.totalorder %s36, 0
  %p38 = pneg %p37
  %40 = shalt.err (%p38)

</llo_original>
